<compile_context>
chip_gen: v6e
topology: v6e:2x2x1
jax: 0.10.0
libtpu: 0.0.40
codegen_flags: <defaults>
</compile_context>

<pallas_src>
import jax
import jax.numpy as jnp
from jax.experimental import pallas as pl
from jax.experimental.pallas import tpu as pltpu

ALPHA = 50.0


def _make_kernel(compute_dtype):
    def kernel(x_ref, o_ref):
        x = x_ref[...]
        if x.dtype != compute_dtype:
            x = x.astype(compute_dtype)
        # Stable sigmoid: alpha=50 makes a naive exp() overflow for |x| > ~2.3.
        o_ref[...] = jax.nn.sigmoid(ALPHA * (x - 0.5)).astype(o_ref.dtype)
    return kernel


def _round_up(a, b):
    return pl.cdiv(a, b) * b


def _vmem_plan():
    """Per-generation (block_bytes, vmem_limit_bytes); conservative fallback."""
    block_bytes, vmem_limit = 4 << 20, 32 << 20          # v5e / v6e (128 MiB VMEM)
    try:
        cap = int(pltpu.get_tpu_info().vmem_capacity_bytes)
        if cap <= (64 << 20):                             # v7x-class: 64 MiB per TC
            block_bytes, vmem_limit = 6 << 20, 40 << 20
    except Exception:
        pass                                              # defaults fit everywhere
    return block_bytes, vmem_limit


def _compute_dtype(x_dtype):
    """bf16 math on v6e/v7x; f32 everywhere else (v5e VPU/EUP lack bf16)."""
    if x_dtype == jnp.bfloat16:
        try:
            kind = jax.devices()[0].device_kind.lower()
            if not any(t in kind for t in ("v2", "v3", "v4", "v5")):
                return jnp.bfloat16
        except Exception:
            pass
    return jnp.float32


def custom_activation(x: jax.Array, *, force_pallas: bool = False) -> jax.Array:
    """Elementwise sharp sigmoid 1/(1+exp(-50*(x-0.5))) via a Pallas TPU kernel."""
    orig_shape, orig_dtype = x.shape, x.dtype
    n = x.size
    if n == 0:
        return x

    block_bytes, vmem_limit = _vmem_plan()
    itemsize = jnp.dtype(orig_dtype).itemsize
    cdtype = _compute_dtype(orig_dtype)
    if cdtype != orig_dtype:
        block_bytes //= 2       # in-kernel upcast doubles the live intermediate
    kernel = _make_kernel(cdtype)
    cparams = pltpu.CompilerParams(
        dimension_semantics=("parallel",),
        vmem_limit_bytes=vmem_limit,
    )

    # Small-input bypass: below ~1 block the custom-call launch + DMA fixed
    # costs dominate; XLA's fused elementwise is at least as fast.
    if not force_pallas and n * itemsize <= block_bytes:
        z = ALPHA * (x.astype(cdtype) - jnp.asarray(0.5, cdtype))
        return jax.nn.sigmoid(z).astype(orig_dtype)

    x_flat = jnp.ravel(x)   # pure reshape, no copy

    # ---------- aligned path: lane-dense 2D layout ----------
    lanes = next((c for c in (1024, 512, 256, 128) if n % c == 0), None)
    if lanes is not None:
        rows = n // lanes
        sub = max(8, 32 // max(itemsize, 1))            # sublane granularity
        tr = max(sub, block_bytes // (lanes * itemsize))
        tr = (tr // sub) * sub
        if tr >= rows:
            tr = rows                                   # full extent (always legal)
        # Keep >= 2 grid steps when possible so v7x megacore can shard the axis.
        if pl.cdiv(rows, tr) < 2 and rows >= 2 * sub:
            tr = _round_up(pl.cdiv(rows, 2), sub)
        num_blocks = pl.cdiv(rows, tr)

        x2d = x_flat.reshape(rows, lanes)
        out2d = pl.pallas_call(
            kernel,
            out_shape=jax.ShapeDtypeStruct((rows, lanes), orig_dtype),
            grid_spec=pltpu.PrefetchScalarGridSpec(
                num_scalar_prefetch=0,
                grid=(num_blocks,),
                in_specs=[pl.BlockSpec((tr, lanes), lambda i: (i, 0))],
                out_specs=pl.BlockSpec((tr, lanes), lambda i: (i, 0)),
            ),
            compiler_params=cparams,
        )(x2d)
        return out2d.reshape(orig_shape)

    # ---------- ragged path: 1D layout, partial last block masked by Pallas ----------
    be = max(1024, (block_bytes // itemsize) // 1024 * 1024)   # multiple of 1024 elems
    if be >= n:
        if n >= 2 * 1024:
            be = _round_up(pl.cdiv(n, 2), 1024)   # >= 2 grid steps for v7x megacore
        else:
            be = n                                # single full-extent block
    num_blocks = pl.cdiv(n, be)

    out1d = pl.pallas_call(
        kernel,
        out_shape=jax.ShapeDtypeStruct((n,), orig_dtype),
        grid_spec=pltpu.PrefetchScalarGridSpec(
            num_scalar_prefetch=0,
            grid=(num_blocks,),
            in_specs=[pl.BlockSpec((be,), lambda i: (i,))],
            out_specs=pl.BlockSpec((be,), lambda i: (i,)),
        ),
        compiler_params=cparams,
    )(x_flat)
    return out1d.reshape(orig_shape)


if __name__ == "__main__":
    key = jax.random.PRNGKey(0)
    k1, k2, k3 = jax.random.split(key, 3)

    def ref_fn(v):
        return 1.0 / (1.0 + jnp.exp(-ALPHA * (v.astype(jnp.float32) - 0.5)))

    # 1) Module-shaped NCHW input through the aligned 2D Pallas path.
    x1 = jax.random.normal(k1, (2, 4, 16, 16), dtype=jnp.float32)
    o1 = jax.block_until_ready(custom_activation(x1, force_pallas=True))
    assert o1.shape == x1.shape and o1.dtype == x1.dtype
    assert jnp.max(jnp.abs(o1 - ref_fn(x1))) < 1e-5

    # 2) Same input through the default small-input XLA bypass.
    o1b = jax.block_until_ready(custom_activation(x1))
    assert jnp.max(jnp.abs(o1b - ref_fn(x1))) < 1e-5

    # 3) Ragged size (not a multiple of 128): 1D Pallas path, two grid steps
    #    with a masked partial last block (no pad/concat/slice in the wrapper).
    x2 = jax.random.normal(k2, (5, 13, 41), dtype=jnp.float32)   # 2665 elements
    o2 = jax.block_until_ready(custom_activation(x2, force_pallas=True))
    assert o2.shape == x2.shape and o2.dtype == x2.dtype
    assert jnp.max(jnp.abs(o2 - ref_fn(x2))) < 1e-5

    # 4) bf16 input (native bf16 math on v6e/v7x, f32 compute on v5e).
    x3 = jax.random.normal(k3, (2, 4, 16, 16), dtype=jnp.bfloat16)
    o3 = jax.block_until_ready(custom_activation(x3, force_pallas=True))
    assert o3.shape == x3.shape and o3.dtype == x3.dtype
    assert jnp.max(jnp.abs(o3.astype(jnp.float32) - ref_fn(x3))) < 2e-2

    print("KERNEL_OK")
</pallas_src>

<mosaic_0001>
module attributes {stable_mosaic.version = 11 : i64} {
  func.func @kernel(%arg0: i32, %arg1: memref<2x1024xf32, #tpu.memory_space<vmem>>, %arg2: memref<2x1024xf32, #tpu.memory_space<vmem>>) attributes {dimension_semantics = [#tpu.dimension_semantics<parallel>], iteration_bounds = array<i64: 1>, scalar_prefetch = 0 : i64, scratch_operands = 0 : i64, tpu.core_type = #tpu.core_type<tc>, window_params = [{transform_indices = @transform_0, window_bounds = array<i64: 2, 1024>}, {transform_indices = @transform_1, window_bounds = array<i64: 2, 1024>}]} {
    %c0 = arith.constant 0 : index
    %c0_0 = arith.constant 0 : index
    %0 = vector.load %arg1[%c0, %c0_0] : memref<2x1024xf32, #tpu.memory_space<vmem>>, vector<2x1024xf32>
    %cst = arith.constant 5.000000e-01 : f32
    %1 = vector.broadcast %cst : f32 to vector<2x1024xf32>
    %2 = arith.subf %0, %1 : vector<2x1024xf32>
    %cst_1 = arith.constant 5.000000e+01 : f32
    %3 = vector.broadcast %cst_1 : f32 to vector<2x1024xf32>
    %4 = arith.mulf %3, %2 : vector<2x1024xf32>
    %5 = arith.negf %4 : vector<2x1024xf32>
    %6 = math.exp %5 : vector<2x1024xf32>
    %cst_2 = arith.constant 1.000000e+00 : f32
    %7 = vector.broadcast %cst_2 : f32 to vector<2x1024xf32>
    %8 = arith.addf %7, %6 : vector<2x1024xf32>
    %9 = arith.divf %7, %8 : vector<2x1024xf32>
    %c0_3 = arith.constant 0 : index
    %c0_4 = arith.constant 0 : index
    %10 = vector.load %arg2[%c0_3, %c0_4] : memref<2x1024xf32, #tpu.memory_space<vmem>>, vector<2x1024xf32>
    tpu.vector_store %arg2[%c0_3, %c0_4], %9 {strides = array<i32>} : memref<2x1024xf32, #tpu.memory_space<vmem>>, vector<2x1024xf32>,
    return
  }
  func.func @transform_0(%arg0: i32) -> (i32, i32) {
    %c0_i32 = arith.constant 0 : i32
    %c0_i32_0 = arith.constant 0 : i32
    return %arg0, %c0_i32 : i32, i32
  }
  func.func @transform_1(%arg0: i32) -> (i32, i32) {
    %c0_i32 = arith.constant 0 : i32
    %c0_i32_0 = arith.constant 0 : i32
    return %arg0, %c0_i32 : i32, i32
  }
}

</mosaic_0001>

<llo_original>
// kernel: tpu_custom_call.1
$region0: #{tpu_custom_call.1}
  #allocation0 [shape = 'u32[]', space=smem, size = 0x4, offset = 0x4, fixed_abs, tag = 'smem constant byte address 0x4 - core index']
  #allocation1 [shape = 'u32[144,128]{1,0:T(1,128)}', space=vmem, size = 0x12000, scoped, tag = 'internal scratch']
  %s0 = inlined_call_operand.hbm [shape: f32[2,1024], index: 0, kind: input, shape index: {}]
  %s1 = inlined_call_operand.hbm [shape: f32[2,1024], index: 1, kind: output, shape index: {}]
  %s2 = sld [smem:[#allocation0]]
  $region18: #{tpu_custom_call.1} parent=0
    _
  %s4 = ssub.s32 1, %s2
  %s5 = scalar_select 0, %s4, %s2
  $region1: #{tpu_custom_call.1} parent=0
    #allocation2 [shape = 'u8[8192]{0}', space=vmem, size = 0x2000, scoped, tag = 'input window, operand 0, single buffered']
    #allocation3 [shape = 's32[1]{0}', space=sflag, size = 0x4, scoped, tag = 'scoped memory for tpu_custom_call.1']
    #allocation4 [shape = 's32[1]{0}', space=sflag, size = 0x4, scoped, tag = 'scoped memory for tpu_custom_call.1']
    #allocation5 [shape = 'u8[8192]{0}', space=vmem, size = 0x2000, scoped, tag = 'output window, operand 0, single buffered']
    %6 = vsyncpa [#allocation3], 0
    %7 = vsyncpa [#allocation4], 0
    // Predicated region
    $region2: #{tpu_custom_call.1} parent=1 // pred_check
      _
    $region3: #{tpu_custom_call.1} parent=1 // pred_check_branch
      %9 = sbr.rel (0) target = $region5
    $region4: #{tpu_custom_call.1} parent=1 // pred_region
      %s11 = ssub.s32 256, 256
      %12 = vsyncadd [#allocation3], %s11
      %s14 = sshll.u32 [#allocation2], 4
      %s15 = int_to_ptr.vmem [resolvable:$true] %s14
      %17 = dma.hbm_to_vmem [thread:$0]  %s0, 256, %s15, [#allocation3]
    $region5: #{tpu_custom_call.1} parent=1 // pred_fallthru
      _
    // Predicated region
    $region6: #{tpu_custom_call.1} parent=1 // pred_check
      _
    $region7: #{tpu_custom_call.1} parent=1 // pred_check_branch
      %19 = sbr.rel (0) target = $region9
    $region8: #{tpu_custom_call.1} parent=1 // pred_region
      %20 = dma.done [#allocation3], 256
    $region9: #{tpu_custom_call.1} parent=1 // pred_fallthru
      _
    %v21 = vld [vmem:[#allocation2] sm:$0xff]
    %v22 = vld [vmem:[#allocation2 + $0x8] sm:$0xff]
    %v23 = vsub.f32 %v21, 0.5
    %v24 = vsub.f32 %v22, 0.5
    %v25 = vmul.f32 %v23, 50.0
    %v26 = vmul.f32 %v24, 50.0
    %v27 = vxor.u32 %v25, 2147483648
    %v28 = vxor.u32 %v26, 2147483648
    %v29 = vmul.f32 %v27, 1.442695
    %v30 = vpow.pop %v29
    %v31 = vmul.f32 %v28, 1.442695
    %v32 = vpow.pop %v31
    %v33 = vadd.f32 %v30, 1.0
    %v34 = vadd.f32 %v32, 1.0
    %v35 = vrcp.pop %v33
    %v36 = vmul.f32 1.0, %v35
    %v37 = vrcp.pop %v34
    %v38 = vmul.f32 1.0, %v37
    %39 = vst [vmem:[#allocation5] sm:$0xff] %v36
    %40 = vst [vmem:[#allocation5 + $0x8] sm:$0xff] %v38
    // Predicated region
    $region10: #{tpu_custom_call.1} parent=1 // pred_check
      _
    $region11: #{tpu_custom_call.1} parent=1 // pred_check_branch
      %42 = sbr.rel (0) target = $region13
    $region12: #{tpu_custom_call.1} parent=1 // pred_region
      %s44 = ssub.s32 256, 256
      %45 = vsyncadd [#allocation4], %s44
      %s47 = sshll.u32 [#allocation5], 4
      %s48 = int_to_ptr.vmem [resolvable:$true] %s47
      %50 = dma.vmem_to_hbm [thread:$0]  %s48, 256, %s1, [#allocation4]
    $region13: #{tpu_custom_call.1} parent=1 // pred_fallthru
      _
    // Predicated region
    $region14: #{tpu_custom_call.1} parent=1 // pred_check
      _
    $region15: #{tpu_custom_call.1} parent=1 // pred_check_branch
      %52 = sbr.rel (0) target = $region17
    $region16: #{tpu_custom_call.1} parent=1 // pred_region
      %53 = dma.done [#allocation4], 256
    $region17: #{tpu_custom_call.1} parent=1 // pred_fallthru
      _
    %54 = vsyncpa [#allocation3], 1
    %55 = vsyncpa [#allocation4], 1

</llo_original>
